<compile_context>
chip_gen: v7x
topology: tpu7x:2x2x1
jax: 0.10.0
libtpu: 0.0.40
codegen_flags: <defaults>
</compile_context>

<pallas_src>
import functools

import jax
import jax.numpy as jnp
from jax.experimental import pallas as pl
from jax.experimental.pallas import tpu as pltpu


def _supcl_kernel(temperature, mxu_bf16, feat_ref, sig_row_ref, sig_col_ref, out_ref):
    f = feat_ref[...].astype(jnp.float32)              # [N, D_pad]
    n = f.shape[0]

    # F.normalize(features, dim=1): denom = max(||x||, eps), eps = 1e-12.
    # Equivalent: rsqrt(max(||x||^2, eps^2)); rsqrt runs on the EUP and the
    # per-element divide becomes a multiply.
    sumsq = jnp.sum(f * f, axis=1, keepdims=True)       # [N, 1]
    inv_norm = jax.lax.rsqrt(jnp.maximum(sumsq, jnp.float32(1e-24)))
    fn = f * inv_norm                                    # [N, D_pad] unit rows

    # Fold 1/temperature into one matmul operand (compile-time constant scale).
    fn_scaled = fn * jnp.float32(1.0 / temperature)

    if mxu_bf16:
        a_mxu = fn_scaled.astype(jnp.bfloat16)
        b_mxu = fn.astype(jnp.bfloat16)
    else:
        a_mxu = fn_scaled
        b_mxu = fn

    # sim[i, j] = <fn_scaled[i], fn[j]>  -- contract last dims directly,
    # no explicit transpose of fn before the MXU.
    sim = jax.lax.dot_general(
        a_mxu, b_mxu,
        dimension_numbers=(((1,), (1,)), ((), ())),
        preferred_element_type=jnp.float32,
    )                                                    # [N, N] f32

    # logits = sim - rowmax(sim)
    logits = sim - jnp.max(sim, axis=1, keepdims=True)

    # mask_similar_class: signals[i] == signals[j]  (1-D label case)
    sig_col = sig_col_ref[...]                           # [N, 1] int32
    sig_row = sig_row_ref[...]                           # [1, N] int32
    same_class = sig_col == sig_row                      # [N, N] bool

    # Off-diagonal mask via iota compare; used only through selects.
    row = jax.lax.broadcasted_iota(jnp.int32, (n, n), 0)
    col = jax.lax.broadcasted_iota(jnp.int32, (n, n), 1)
    off_diag = row != col                                # [N, N] bool

    pos_mask = jnp.logical_and(same_class, off_diag)     # positives mask (bool)
    cardinality = jnp.sum(jnp.where(pos_mask, 1.0, 0.0), axis=1, keepdims=True)

    # exp_logits with the diagonal zeroed via select (no f32 eye matrix).
    exp_logits = jnp.where(off_diag, jnp.exp(logits), 0.0)
    denom = jnp.sum(exp_logits, axis=1, keepdims=True)   # [N, 1]
    log_prob = logits - jnp.log(denom)                   # [N, N]

    # Sum log-prob over positives via select (no f32 mask multiply).
    pos_log_prob = jnp.where(pos_mask, log_prob, 0.0)
    per_sample = jnp.sum(pos_log_prob, axis=1, keepdims=True) / cardinality  # [N, 1]

    # loss = -mean(per_sample)
    loss = -jnp.sum(per_sample, axis=0, keepdims=True) / jnp.float32(n)      # [1, 1]
    out_ref[...] = loss


def supcl_loss(features, signals, temperature=0.07, mxu_bf16=False):
    """features: [N, D] float32, signals: [N] int class labels -> scalar loss.

    Note: like the PyTorch reference, a sample with no same-class positive
    (cardinality == 0) yields Inf/NaN that propagates into the mean.
    """
    n, d = features.shape

    # Zero-pad D to a multiple of 128 (full lane / MXU-K occupancy); zeros do
    # not change row norms or dot products.
    d_pad = max(128, ((d + 127) // 128) * 128)
    if d_pad != d:
        features = jnp.pad(features, ((0, 0), (0, d_pad - d)))

    sig = signals.astype(jnp.int32)
    sig_row = sig.reshape(1, n)   # both orientations built in the wrapper so
    sig_col = sig.reshape(n, 1)   # the kernel does no lane<->sublane shuffle

    # VMEM budget: features (+ optional bf16 copies) plus ~4 live NxN f32
    # temporaries, double-buffering slack; clamp to stay within v7x's 64 MiB.
    est_bytes = 4 * (4 * n * n + 3 * n * d_pad) + (1 << 20)
    vmem_limit = int(min(max(2 * est_bytes, 32 * 2**20), 48 * 2**20))

    kernel = functools.partial(_supcl_kernel, float(temperature), bool(mxu_bf16))
    out = pl.pallas_call(
        kernel,
        out_shape=jax.ShapeDtypeStruct((1, 1), jnp.float32),
        in_specs=[
            pl.BlockSpec((n, d_pad), lambda: (0, 0)),   # full features block
            pl.BlockSpec((1, n), lambda: (0, 0)),       # labels as a row
            pl.BlockSpec((n, 1), lambda: (0, 0)),       # labels as a column
        ],
        out_specs=pl.BlockSpec((1, 1), lambda: (0, 0)),
        compiler_params=pltpu.CompilerParams(vmem_limit_bytes=vmem_limit),
    )(features, sig_row, sig_col)
    return out[0, 0]


def _supcl_loss_ref(features, signals, temperature=0.07):
    """Pure-JAX reference mirroring SupCLforTable.supcon_loss (1-D signals)."""
    f = features / jnp.maximum(
        jnp.sqrt(jnp.sum(features * features, axis=1, keepdims=True)), 1e-12)
    sim = jnp.dot(f, f.T) / temperature
    logits = sim - jnp.max(sim, axis=1, keepdims=True)
    mask_sim = (signals[:, None] == signals[None, :]).astype(jnp.float32)
    n = features.shape[0]
    mask_anchor = 1.0 - jnp.eye(n, dtype=jnp.float32)
    mask_comb = mask_sim * mask_anchor
    card = jnp.sum(mask_comb, axis=1)
    exp_logits = jnp.exp(logits) * mask_anchor
    log_prob = logits - jnp.log(jnp.sum(exp_logits, axis=1, keepdims=True))
    per_sample = jnp.sum(log_prob * mask_comb, axis=1) / card
    return -jnp.mean(per_sample)


if __name__ == "__main__":
    key = jax.random.PRNGKey(0)
    N, D = 8, 32  # small batch of column embeddings
    kf, _ = jax.random.split(key)
    features = jax.random.normal(kf, (N, D), dtype=jnp.float32)
    # labels with repeats so every sample has at least one positive
    signals = jnp.array([0, 1, 0, 1, 2, 2, 0, 1], dtype=jnp.int32)

    ref = _supcl_loss_ref(features, signals, temperature=0.07)

    # f32 MXU path (bit-faithful to the PyTorch formulation up to fp rounding).
    loss = supcl_loss(features, signals, temperature=0.07)
    jax.block_until_ready(loss)
    assert jnp.isfinite(loss), "non-finite loss (f32 path)"
    assert jnp.allclose(loss, ref, rtol=1e-4, atol=1e-4), (loss, ref)

    # bf16-operand MXU path (f32 accumulation); tolerance loosened deliberately
    # for the bf16 cast of the similarity-matmul operands.
    loss_bf16 = supcl_loss(features, signals, temperature=0.07, mxu_bf16=True)
    jax.block_until_ready(loss_bf16)
    assert jnp.isfinite(loss_bf16), "non-finite loss (bf16 path)"
    assert jnp.allclose(loss_bf16, ref, rtol=1e-1, atol=1e-1), (loss_bf16, ref)

    print("KERNEL_OK")
</pallas_src>

<mosaic_0001>
module attributes {stable_mosaic.version = 11 : i64} {
  func.func @_supcl_kernel(%arg0: memref<8x128xf32, #tpu.memory_space<vmem>>, %arg1: memref<1x8xi32, #tpu.memory_space<vmem>>, %arg2: memref<8x1xi32, #tpu.memory_space<vmem>>, %arg3: memref<1x1xf32, #tpu.memory_space<vmem>>) attributes {dimension_semantics = [], scalar_prefetch = 0 : i64, scratch_operands = 0 : i64, tpu.core_type = #tpu.core_type<tc>} {
    %c0 = arith.constant 0 : index
    %c0_0 = arith.constant 0 : index
    %0 = vector.load %arg0[%c0, %c0_0] : memref<8x128xf32, #tpu.memory_space<vmem>>, vector<8x128xf32>
    %1 = arith.mulf %0, %0 : vector<8x128xf32>
    %cst = arith.constant dense<0.000000e+00> : vector<8xf32>
    %2 = vector.multi_reduction <add>, %1, %cst [1] : vector<8x128xf32> to vector<8xf32>
    %3 = vector.shape_cast %2 : vector<8xf32> to vector<8x1xf32>
    %cst_1 = arith.constant 1.000000e-24 : f32
    %4 = vector.broadcast %cst_1 : f32 to vector<8x1xf32>
    %5 = arith.maximumf %3, %4 : vector<8x1xf32>
    %6 = math.rsqrt %5 : vector<8x1xf32>
    %7 = vector.broadcast %6 : vector<8x1xf32> to vector<8x128xf32>
    %8 = arith.mulf %0, %7 : vector<8x128xf32>
    %cst_2 = arith.constant 14.2857141 : f32
    %9 = vector.broadcast %cst_2 : f32 to vector<8x128xf32>
    %10 = arith.mulf %8, %9 : vector<8x128xf32>
    %cst_3 = arith.constant dense<0.000000e+00> : vector<8x8xf32>
    %11 = tpu.matmul %10, %8, %cst_3 {dimension_numbers = #tpu.dot_dimension_numbers<[1], [1], [0], [0], [0, 0, 1, 0], [], []>} : vector<8x128xf32>, vector<8x128xf32>, vector<8x8xf32> -> vector<8x8xf32>
    %cst_4 = arith.constant dense<0xFF800000> : vector<8xf32>
    %12 = vector.multi_reduction <maximumf>, %11, %cst_4 [1] : vector<8x8xf32> to vector<8xf32>
    %13 = vector.shape_cast %12 : vector<8xf32> to vector<8x1xf32>
    %14 = vector.broadcast %13 : vector<8x1xf32> to vector<8x8xf32>
    %15 = arith.subf %11, %14 : vector<8x8xf32>
    %c0_5 = arith.constant 0 : index
    %c0_6 = arith.constant 0 : index
    %16 = vector.load %arg2[%c0_5, %c0_6] : memref<8x1xi32, #tpu.memory_space<vmem>>, vector<8x1xi32>
    %c0_7 = arith.constant 0 : index
    %c0_8 = arith.constant 0 : index
    %17 = vector.load %arg1[%c0_7, %c0_8] : memref<1x8xi32, #tpu.memory_space<vmem>>, vector<1x8xi32>
    %18 = vector.broadcast %16 : vector<8x1xi32> to vector<8x8xi32>
    %19 = vector.broadcast %17 : vector<1x8xi32> to vector<8x8xi32>
    %20 = arith.cmpi eq, %18, %19 : vector<8x8xi32>
    %21 = tpu.iota {dimensions = array<i32: 0>} : vector<8x8xi32>
    %22 = tpu.iota {dimensions = array<i32: 1>} : vector<8x8xi32>
    %23 = arith.cmpi ne, %21, %22 : vector<8x8xi32>
    %24 = arith.andi %20, %23 : vector<8x8xi1>
    %cst_9 = arith.constant 1.000000e+00 : f32
    %cst_10 = arith.constant 0.000000e+00 : f32
    %25 = vector.broadcast %cst_9 : f32 to vector<8x8xf32>
    %26 = vector.broadcast %cst_10 : f32 to vector<8x8xf32>
    %27 = arith.select %24, %25, %26 : vector<8x8xi1>, vector<8x8xf32>
    %cst_11 = arith.constant dense<0.000000e+00> : vector<8xf32>
    %28 = vector.multi_reduction <add>, %27, %cst_11 [1] : vector<8x8xf32> to vector<8xf32>
    %29 = vector.shape_cast %28 : vector<8xf32> to vector<8x1xf32>
    %30 = math.exp %15 : vector<8x8xf32>
    %cst_12 = arith.constant 0.000000e+00 : f32
    %31 = vector.broadcast %cst_12 : f32 to vector<8x8xf32>
    %32 = arith.select %23, %30, %31 : vector<8x8xi1>, vector<8x8xf32>
    %cst_13 = arith.constant dense<0.000000e+00> : vector<8xf32>
    %33 = vector.multi_reduction <add>, %32, %cst_13 [1] : vector<8x8xf32> to vector<8xf32>
    %34 = vector.shape_cast %33 : vector<8xf32> to vector<8x1xf32>
    %35 = math.log %34 : vector<8x1xf32>
    %36 = vector.broadcast %35 : vector<8x1xf32> to vector<8x8xf32>
    %37 = arith.subf %15, %36 : vector<8x8xf32>
    %cst_14 = arith.constant 0.000000e+00 : f32
    %38 = vector.broadcast %cst_14 : f32 to vector<8x8xf32>
    %39 = arith.select %24, %37, %38 : vector<8x8xi1>, vector<8x8xf32>
    %cst_15 = arith.constant dense<0.000000e+00> : vector<8xf32>
    %40 = vector.multi_reduction <add>, %39, %cst_15 [1] : vector<8x8xf32> to vector<8xf32>
    %41 = vector.shape_cast %40 : vector<8xf32> to vector<8x1xf32>
    %42 = arith.divf %41, %29 : vector<8x1xf32>
    %cst_16 = arith.constant dense<0.000000e+00> : vector<1xf32>
    %43 = vector.multi_reduction <add>, %42, %cst_16 [0] : vector<8x1xf32> to vector<1xf32>
    %44 = vector.shape_cast %43 : vector<1xf32> to vector<1x1xf32>
    %cst_17 = arith.constant 0.000000e+00 : f32
    %45 = vector.broadcast %cst_17 : f32 to vector<1x1xf32>
    %46 = arith.subf %45, %44 : vector<1x1xf32>
    %cst_18 = arith.constant 8.000000e+00 : f32
    %47 = vector.broadcast %cst_18 : f32 to vector<1x1xf32>
    %48 = arith.divf %46, %47 : vector<1x1xf32>
    %c0_19 = arith.constant 0 : index
    %c0_20 = arith.constant 0 : index
    %49 = vector.load %arg3[%c0_19, %c0_20] : memref<1x1xf32, #tpu.memory_space<vmem>>, vector<1x1xf32>
    tpu.vector_store %arg3[%c0_19, %c0_20], %48 {strides = array<i32>} : memref<1x1xf32, #tpu.memory_space<vmem>>, vector<1x1xf32>,
    return
  }
}

</mosaic_0001>

<llo_original>
// kernel: tpu_custom_call.1
$region0: #{tpu_custom_call.1}
  #allocation0 [shape = 'u32[]', space=smem, size = 0x4, offset = 0x4, fixed_abs, tag = 'smem constant byte address 0x4 - core index']
  #allocation1 [shape = 'u32[144,128]{1,0:T(1,128)}', space=vmem, size = 0x12000, scoped, tag = 'internal scratch']
  %s0 = inlined_call_operand.vmem [shape: f32[8,128], index: 0, kind: input, shape index: {}]
  %s1 = inlined_call_operand.vmem [shape: s32[1,8], index: 1, kind: input, shape index: {}]
  %s2 = inlined_call_operand.vmem [shape: s32[8,1], index: 2, kind: input, shape index: {}]
  %s3 = inlined_call_operand.hbm [shape: f32[1,1], index: 3, kind: output, shape index: {}]
  %s4 = sld [smem:[#allocation0]]
  $region22: #{tpu_custom_call.1} parent=0
    _
  %s6 = ssub.s32 1, %s4
  %s7 = scalar_select 0, %s6, %s4
  $region1: #{tpu_custom_call.1} parent=0
    #allocation2 [shape = 'u8[512]{0}', space=vmem, size = 0x400, scoped, tag = 'output window, operand 0, single buffered']
    #allocation3 [shape = 's32[1]{0}', space=sflag, size = 0x4, scoped, tag = 'scoped memory for tpu_custom_call.1']
    %8 = vsyncpa [#allocation3], 0
    // Predicated region
    $region2: #{tpu_custom_call.1} parent=1 // pred_check
      _
    $region3: #{tpu_custom_call.1} parent=1 // pred_check_branch
      %10 = sbr.rel (0) target = $region5
    $region4: #{tpu_custom_call.1} parent=1 // pred_region
      _
    $region5: #{tpu_custom_call.1} parent=1 // pred_fallthru
      _
    // Predicated region
    $region6: #{tpu_custom_call.1} parent=1 // pred_check
      _
    $region7: #{tpu_custom_call.1} parent=1 // pred_check_branch
      %12 = sbr.rel (0) target = $region9
    $region8: #{tpu_custom_call.1} parent=1 // pred_region
      _
    $region9: #{tpu_custom_call.1} parent=1 // pred_fallthru
      _
    // Predicated region
    $region10: #{tpu_custom_call.1} parent=1 // pred_check
      _
    $region11: #{tpu_custom_call.1} parent=1 // pred_check_branch
      %14 = sbr.rel (0) target = $region13
    $region12: #{tpu_custom_call.1} parent=1 // pred_region
      _
    $region13: #{tpu_custom_call.1} parent=1 // pred_fallthru
      _
    %v15 = vld [vmem:[%s0] sm:$0xff]
    %v16 = vmul.f32 %v15, %v15
    %17 = vadd.xlane.f32.xlu0 %v16
    %v18 = vpop.xlane.xlu0 %17
    %v19 = vmax.f32 %v18, 1e-24
    %v20 = vrsqrt.pop %v19
    %v21 = vmul.f32 %v15, %v20
    %v22 = vmul.f32 %v21, 14.285714
    %23 = vmatprep.subr.mxu0 0.0
    %24 = vmatpush1.xpose.msra.mxu0 %v21
    %25 = vmatprep.subr.mxu0 0.0
    %26 = vmatpush1.xpose.msra.mxu0 0.0
    %27 = vmatprep.subr.mxu0 0.0
    %28 = vmatpush1.xpose.msra.mxu0 0.0
    %29 = vmatprep.subr.mxu0 0.0
    %30 = vmatpush1.xpose.msra.mxu0 0.0
    %31 = vmatprep.subr.mxu0 0.0
    %32 = vmatpush1.xpose.msra.mxu0 0.0
    %33 = vmatprep.subr.mxu0 0.0
    %34 = vmatpush1.xpose.msra.mxu0 0.0
    %35 = vmatprep.subr.mxu0 0.0
    %36 = vmatpush1.xpose.msra.mxu0 0.0
    %37 = vmatprep.subr.mxu0 0.0
    %38 = vmatpush1.xpose.msra.mxu0 0.0
    %39 = vmatprep.subr.mxu0 0.0
    %40 = vmatpush1.xpose.msra.mxu0 0.0
    %41 = vmatprep.subr.mxu0 0.0
    %42 = vmatpush1.xpose.msra.mxu0 0.0
    %43 = vmatprep.subr.mxu0 0.0
    %44 = vmatpush1.xpose.msra.mxu0 0.0
    %45 = vmatprep.subr.mxu0 0.0
    %46 = vmatpush1.xpose.msra.mxu0 0.0
    %47 = vmatprep.subr.mxu0 0.0
    %48 = vmatpush1.xpose.msra.mxu0 0.0
    %49 = vmatprep.subr.mxu0 0.0
    %50 = vmatpush1.xpose.msra.mxu0 0.0
    %51 = vmatprep.subr.mxu0 0.0
    %52 = vmatpush1.xpose.msra.mxu0 0.0
    %53 = vmatprep.subr.mxu0 0.0
    %54 = vmatpush1.xpose.msra.mxu0 0.0
    %55 = vmatprep.subr.mxu0 0.0
    %56 = vmatpush1.xpose.msra.mxu0 0.0
    %57 = vmatprep.subr.mxu0 0.0
    %58 = vmatpush1.xpose.msra.mxu0 0.0
    %59 = vmatprep.subr.mxu0 0.0
    %60 = vmatpush1.xpose.msra.mxu0 0.0
    %61 = vmatprep.subr.mxu0 0.0
    %62 = vmatpush1.xpose.msra.mxu0 0.0
    %63 = vmatprep.subr.mxu0 0.0
    %64 = vmatpush1.xpose.msra.mxu0 0.0
    %65 = vmatprep.subr.mxu0 0.0
    %66 = vmatpush1.xpose.msra.mxu0 0.0
    %67 = vmatprep.subr.mxu0 0.0
    %68 = vmatpush1.xpose.msra.mxu0 0.0
    %69 = vmatprep.subr.mxu0 0.0
    %70 = vmatpush1.xpose.msra.mxu0 0.0
    %71 = vmatprep.subr.mxu0 0.0
    %72 = vmatpush1.xpose.msra.mxu0 0.0
    %73 = vmatprep.subr.mxu0 0.0
    %74 = vmatpush1.xpose.msra.mxu0 0.0
    %75 = vmatprep.subr.mxu0 0.0
    %76 = vmatpush1.xpose.msra.mxu0 0.0
    %77 = vmatprep.subr.mxu0 0.0
    %78 = vmatpush1.xpose.msra.mxu0 0.0
    %79 = vmatprep.subr.mxu0 0.0
    %80 = vmatpush1.xpose.msra.mxu0 0.0
    %81 = vmatprep.subr.mxu0 0.0
    %82 = vmatpush1.xpose.msra.mxu0 0.0
    %83 = vmatprep.subr.mxu0 0.0
    %84 = vmatpush1.xpose.msra.mxu0 0.0
    %85 = vmatprep.subr.mxu0 0.0
    %86 = vmatpush1.xpose.msra.mxu0 0.0
    %87 = vmatprep.mubr.f32.mxu0 0.0
    %88 = vmatmul.mubr.f32.gmra.mrb[0].mxu0 %v22
    %v89 = vpop.f32.mrb[0].mxu0
    %v90 = vadd.f32 0.0, %v89
    %v91 = vpop.f32.mrb[0].mxu0
    %92 = vdwg.mxu0
    %vm93 = vcmask 64512
    %v94 = vsel %vm93, %v90, -inf
    %95 = vmax.xlane.f32.xlu0 %v94
    %v96 = vpop.xlane.xlu0 %95
    %v97 = vsub.f32 %v90, %v96
    %v98 = vld [vmem:[%s2] sm:$0xff]
    %v99 = vld [vmem:[%s1] sm:$0x1]
    %100 = vset.pattern.permute.xlu0 0
    %101 = vperm.xlu0 %100, %v98
    %v102 = vpop.permute.xlu0 %101
    %v103 = vlaneseq
    %v104 = vshrl.u32 %v103, 7
    %v105 = vsub.s32 0, %v104
    %v106 = vrot.slane %v99, %v105
    %vm107 = vcmp.eq.s32.totalorder %v102, %v106
    %v108 = vlaneseq
    %v109 = vshrl.u32 %v108, 7
    %v110 = vlaneseq
    %v111 = vand.u32 %v110, 127
    %vm112 = vcmp.ne.s32.totalorder %v109, %v111
    %vm113 = vmand %vm107, %vm112
    %v114 = vsel %vm113, 1.0, 0.0
    %v115 = vsel %vm93, %v114, 0.0
    %116 = vadd.xlane.f32.xlu0 %v115
    %v117 = vpop.xlane.xlu0 %116
    %v118 = vmul.f32 %v97, 1.442695
    %v119 = vpow.pop %v118
    %v120 = vsel %vm112, %v119, 0.0
    %v121 = vsel %vm93, %v120, 0.0
    %122 = vadd.xlane.f32.xlu0 %v121
    %v123 = vpop.xlane.xlu0 %122
    %v124 = vlog2.pop %v123
    %v125 = vmul.f32 %v124, 0.6931472
    %v126 = vsub.f32 %v97, %v125
    %v127 = vsel %vm113, %v126, 0.0
    %v128 = vsel %vm93, %v127, 0.0
    %129 = vadd.xlane.f32.xlu0 %v128
    %v130 = vpop.xlane.xlu0 %129
    %v131 = vrcp.pop %v117
    %v132 = vmul.f32 %v130, %v131
    %v133 = vrot.slane %v132, 4
    %v134 = vadd.f32 %v132, %v133
    %v135 = vrot.slane %v134, 2
    %v136 = vadd.f32 %v134, %v135
    %v137 = vrot.slane %v136, 1
    %v138 = vadd.f32 %v136, %v137
    %v139 = vsub.f32 0.0, %v138
    %v140 = vrcp.pop 8.0
    %v141 = vmul.f32 %v139, %v140
    %vm142 = vcmask 0
    %143 = vst.msk [vmem:[#allocation2] sm:$0x1] %vm142, %v141
    // Predicated region
    $region14: #{tpu_custom_call.1} parent=1 // pred_check
      _
    $region15: #{tpu_custom_call.1} parent=1 // pred_check_branch
      %145 = sbr.rel (0) target = $region17
    $region16: #{tpu_custom_call.1} parent=1 // pred_region
      %s147 = ssub.s32 16, 16
      %148 = vsyncadd [#allocation3], %s147
      %s150 = sshll.u32 [#allocation2], 4
      %s151 = int_to_ptr.vmem [resolvable:$true] %s150
      %153 = dma.vmem_to_hbm [thread:$0]  %s151, 16, %s3, [#allocation3]
    $region17: #{tpu_custom_call.1} parent=1 // pred_fallthru
      _
    // Predicated region
    $region18: #{tpu_custom_call.1} parent=1 // pred_check
      _
    $region19: #{tpu_custom_call.1} parent=1 // pred_check_branch
      %155 = sbr.rel (0) target = $region21
    $region20: #{tpu_custom_call.1} parent=1 // pred_region
      %156 = dma.done [#allocation3], 16
    $region21: #{tpu_custom_call.1} parent=1 // pred_fallthru
      _
    %157 = vsyncpa [#allocation3], 1

</llo_original>
